<compile_context>
chip_gen: v7x
topology: tpu7x:2x2x1
jax: 0.10.0
libtpu: 0.0.40
codegen_flags: <defaults>
</compile_context>

<pallas_src>
import jax
import jax.numpy as jnp
from jax.experimental import pallas as pl
from jax.experimental.pallas import tpu as pltpu


E_PAD = 128      # lane-aligned width for edges / one-hot / vocab rows
TILE_N = 512     # rows of time values per grid step


def _round_up(x, m):
    return ((x + m - 1) // m) * m


def duration_encoding_kernel(tv_ref, edges_ref, emb_ref, out_ref):
    """tv_ref: (T, 1) f32 time values,
    edges_ref: (1, 128) f32 = [-inf, e_0 .. e_{E-1}, +inf pad ...],
    emb_ref:  (128, D) f32 (row j = bucket j, row E = clamp row, rest zero),
    out_ref:  (T, D) f32."""
    v = tv_ref[...]                                   # (T, 1)
    edges = edges_ref[...]                            # (1, 128)
    # Monotone prefix of ones: less[j] == 1  iff  edges[j] < v.
    less = (edges < v).astype(jnp.float32)            # (T, 128)
    # One-hot at the bucket index = the 1 -> 0 transition lane.
    # roll by E_PAD-1 == roll by -1; the wraparound puts a -1 in lane 127,
    # which multiplies a guaranteed-zero embedding row (harmless).
    nxt = pltpu.roll(less, shift=E_PAD - 1, axis=1)   # nxt[j] = less[j+1]
    onehot = less - nxt                               # (T, 128), values in {-1,0,1}
    # Embedding gather as one-hot @ table on the MXU (128-wide contraction).
    out_ref[...] = jnp.dot(onehot, emb_ref[...],
                           preferred_element_type=jnp.float32)


def duration_encoding_pallas(time_value, edges_pad, emb_pad):
    """time_value: (N,) f32; edges_pad: (1, 128) f32; emb_pad: (128, dim) f32."""
    n = time_value.shape[0]
    dim = emb_pad.shape[1]

    tile_n = min(TILE_N, max(8, _round_up(n, 8)))
    n_pad = _round_up(n, tile_n)

    tv_pad = jnp.zeros((n_pad, 1), jnp.float32).at[:n, 0].set(
        time_value.astype(jnp.float32))

    out = pl.pallas_call(
        duration_encoding_kernel,
        out_shape=jax.ShapeDtypeStruct((n_pad, dim), jnp.float32),
        grid=(n_pad // tile_n,),
        in_specs=[
            pl.BlockSpec((tile_n, 1), lambda i: (i, 0)),
            pl.BlockSpec((1, E_PAD), lambda i: (0, 0)),
            pl.BlockSpec((E_PAD, dim), lambda i: (0, 0)),
        ],
        out_specs=pl.BlockSpec((tile_n, dim), lambda i: (i, 0)),
        compiler_params=pltpu.CompilerParams(
            dimension_semantics=("parallel",)),
    )(tv_pad, edges_pad, emb_pad)
    return out[:n]


def _pad_edges(edges):
    """(E,) sorted edges -> (1, 128): [-inf, e_0 .. e_{E-1}, +inf, ...]."""
    e = edges.shape[0]
    out = jnp.full((1, E_PAD), jnp.inf, jnp.float32)
    out = out.at[0, 0].set(-jnp.inf)
    out = out.at[0, 1:e + 1].set(edges.astype(jnp.float32))
    return out


def _pad_table(table):
    """(V, dim) table -> (128, dim): rows 0..V-1 = table, row V = table[V-1]
    (clamp for bucket == V, i.e. value beyond the last edge), rest zero."""
    v, dim = table.shape
    out = jnp.zeros((E_PAD, dim), jnp.float32)
    out = out.at[:v, :].set(table.astype(jnp.float32))
    out = out.at[v, :].set(table[v - 1].astype(jnp.float32))
    return out


class DurationEncodingPallas:
    """JAX/Pallas port of model/MFAE.py::DurationEncoding with synthetic,
    deterministically-initialized quantile edges and embedding tables."""

    def __init__(self, dim, key):
        self.result_dim = dim
        k = jax.random.split(key, 8)
        # synthetic duration stats standing in for the json-loaded lists
        all_seg_duration = jax.random.uniform(k[0], (512,), jnp.float32, 0.1, 10.0)
        all_seg_dura_ratio = jax.random.uniform(k[1], (512,), jnp.float32, 0.0, 1.0)
        ocr_all_seg_duration = jax.random.uniform(k[2], (512,), jnp.float32, 0.1, 10.0)
        ocr_all_seg_dura_ratio = jax.random.uniform(k[3], (512,), jnp.float32, 0.0, 1.0)

        q101 = jnp.linspace(0.0, 1.0, 101)
        q51 = jnp.linspace(0.0, 1.0, 51)
        self.absolute_bin_edges = jnp.quantile(all_seg_duration, q101)
        self.relative_bin_edges = jnp.quantile(all_seg_dura_ratio, q51)
        self.ocr_absolute_bin_edges = jnp.quantile(ocr_all_seg_duration, q101)
        self.ocr_relative_bin_edges = jnp.quantile(ocr_all_seg_dura_ratio, q51)

        self.ab_duration_embed = jax.random.normal(k[4], (101, dim), jnp.float32)
        self.re_duration_embed = jax.random.normal(k[5], (51, dim), jnp.float32)
        self.ocr_ab_duration_embed = jax.random.normal(k[6], (101, dim), jnp.float32)
        self.ocr_re_duration_embed = jax.random.normal(k[7], (51, dim), jnp.float32)

        # Pre-padded constants for the kernel (built once, reused every call).
        self._padded = {
            'natural_ab': (_pad_edges(self.absolute_bin_edges),
                           _pad_table(self.ab_duration_embed)),
            'natural_re': (_pad_edges(self.relative_bin_edges),
                           _pad_table(self.re_duration_embed)),
            'ocr_ab': (_pad_edges(self.ocr_absolute_bin_edges),
                       _pad_table(self.ocr_ab_duration_embed)),
            'ocr_re': (_pad_edges(self.ocr_relative_bin_edges),
                       _pad_table(self.ocr_re_duration_embed)),
        }

    def __call__(self, time_value, attribute):
        if attribute not in self._padded:
            raise ValueError(attribute)
        edges_pad, emb_pad = self._padded[attribute]

        time_value = jnp.asarray(time_value, jnp.float32)
        if time_value.shape[0] == 0:
            return jnp.zeros((1, self.result_dim), jnp.float32)
        return duration_encoding_pallas(time_value, edges_pad, emb_pad)


def _reference(time_value, edges, table):
    idx = jnp.searchsorted(edges.astype(jnp.float32),
                           jnp.asarray(time_value, jnp.float32), side='left')
    return table[idx]   # JAX gather clamps out-of-range indices


if __name__ == "__main__":
    key = jax.random.PRNGKey(0)
    k_mod, k_in, k_big = jax.random.split(key, 3)

    dim = 32
    module = DurationEncodingPallas(dim, k_mod)

    # N=8 segment duration values, including deliberately out-of-range ones
    # to exercise the clamped last / first bucket.
    time_value = jax.random.uniform(k_in, (8,), jnp.float32, 0.1, 10.0)
    time_value = time_value.at[3].set(1000.0)
    time_value = time_value.at[5].set(-1.0)

    branches = {
        'natural_ab': (module.absolute_bin_edges, module.ab_duration_embed),
        'natural_re': (module.relative_bin_edges, module.re_duration_embed),
        'ocr_ab': (module.ocr_absolute_bin_edges, module.ocr_ab_duration_embed),
        'ocr_re': (module.ocr_relative_bin_edges, module.ocr_re_duration_embed),
    }

    ok = True
    for attr, (ref_edges, ref_tbl) in branches.items():
        out = jax.block_until_ready(module(time_value, attr))
        ref = _reference(time_value, ref_edges, ref_tbl)
        if out.shape != (8, dim) or not jnp.allclose(out, ref, atol=1e-5):
            ok = False

    # Multi-tile path (grid > 1, padded N) on one branch.
    big_tv = jax.random.uniform(k_big, (700,), jnp.float32, 0.0, 12.0)
    big_out = jax.block_until_ready(module(big_tv, 'natural_ab'))
    big_ref = _reference(big_tv, module.absolute_bin_edges, module.ab_duration_embed)
    ok = ok and big_out.shape == (700, dim) and bool(
        jnp.allclose(big_out, big_ref, atol=1e-5))

    # empty-input branch: returns zeros((1, dim))
    empty_out = jax.block_until_ready(module(jnp.zeros((0,), jnp.float32), 'natural_ab'))
    ok = ok and empty_out.shape == (1, dim) and bool(jnp.all(empty_out == 0))

    if ok:
        print("KERNEL_OK")
</pallas_src>

<mosaic_0001>
module attributes {stable_mosaic.version = 11 : i64} {
  func.func @duration_encoding_kernel(%arg0: i32, %arg1: memref<8x1xf32, #tpu.memory_space<vmem>>, %arg2: memref<1x128xf32, #tpu.memory_space<vmem>>, %arg3: memref<128x32xf32, #tpu.memory_space<vmem>>, %arg4: memref<8x32xf32, #tpu.memory_space<vmem>>) attributes {dimension_semantics = [#tpu.dimension_semantics<parallel>], iteration_bounds = array<i64: 1>, scalar_prefetch = 0 : i64, scratch_operands = 0 : i64, tpu.core_type = #tpu.core_type<tc>, window_params = [{transform_indices = @transform_0, window_bounds = array<i64: 8, 1>}, {pipeline_mode = #tpu.pipeline_mode<synchronous>, transform_indices = @transform_1, window_bounds = array<i64: 1, 128>}, {pipeline_mode = #tpu.pipeline_mode<synchronous>, transform_indices = @transform_2, window_bounds = array<i64: 128, 32>}, {transform_indices = @transform_3, window_bounds = array<i64: 8, 32>}]} {
    %c0 = arith.constant 0 : index
    %c0_0 = arith.constant 0 : index
    %0 = vector.load %arg1[%c0, %c0_0] : memref<8x1xf32, #tpu.memory_space<vmem>>, vector<8x1xf32>
    %c0_1 = arith.constant 0 : index
    %c0_2 = arith.constant 0 : index
    %1 = vector.load %arg2[%c0_1, %c0_2] : memref<1x128xf32, #tpu.memory_space<vmem>>, vector<1x128xf32>
    %2 = vector.broadcast %1 : vector<1x128xf32> to vector<8x128xf32>
    %3 = vector.broadcast %0 : vector<8x1xf32> to vector<8x128xf32>
    %4 = arith.cmpf olt, %2, %3 : vector<8x128xf32>
    %5 = arith.extui %4 : vector<8x128xi1> to vector<8x128xi32>
    %6 = arith.sitofp %5 : vector<8x128xi32> to vector<8x128xf32>
    %c127_i32 = arith.constant 127 : i32
    %7 = tpu.dynamic_rotate %6 by %c127_i32 dim 1 : vector<8x128xf32>, i32 -> vector<8x128xf32>
    %8 = arith.subf %6, %7 : vector<8x128xf32>
    %c0_3 = arith.constant 0 : index
    %c0_4 = arith.constant 0 : index
    %9 = vector.load %arg3[%c0_3, %c0_4] : memref<128x32xf32, #tpu.memory_space<vmem>>, vector<128x32xf32>
    %cst = arith.constant dense<0.000000e+00> : vector<8x32xf32>
    %10 = tpu.matmul %8, %9, %cst {dimension_numbers = #tpu.dot_dimension_numbers<[1], [0], [0], [1], [0, 0, 1, 1], [], []>} : vector<8x128xf32>, vector<128x32xf32>, vector<8x32xf32> -> vector<8x32xf32>
    %c0_5 = arith.constant 0 : index
    %c0_6 = arith.constant 0 : index
    %11 = vector.load %arg4[%c0_5, %c0_6] : memref<8x32xf32, #tpu.memory_space<vmem>>, vector<8x32xf32>
    tpu.vector_store %arg4[%c0_5, %c0_6], %10 {strides = array<i32>} : memref<8x32xf32, #tpu.memory_space<vmem>>, vector<8x32xf32>,
    return
  }
  func.func @transform_0(%arg0: i32) -> (i32, i32) {
    %c0_i32 = arith.constant 0 : i32
    %c0_i32_0 = arith.constant 0 : i32
    return %arg0, %c0_i32 : i32, i32
  }
  func.func @transform_1(%arg0: i32) -> (i32, i32) {
    %c0_i32 = arith.constant 0 : i32
    %c0_i32_0 = arith.constant 0 : i32
    %c0_i32_1 = arith.constant 0 : i32
    return %c0_i32, %c0_i32_0 : i32, i32
  }
  func.func @transform_2(%arg0: i32) -> (i32, i32) {
    %c0_i32 = arith.constant 0 : i32
    %c0_i32_0 = arith.constant 0 : i32
    %c0_i32_1 = arith.constant 0 : i32
    return %c0_i32, %c0_i32_0 : i32, i32
  }
  func.func @transform_3(%arg0: i32) -> (i32, i32) {
    %c0_i32 = arith.constant 0 : i32
    %c0_i32_0 = arith.constant 0 : i32
    return %arg0, %c0_i32 : i32, i32
  }
}

</mosaic_0001>

<llo_original>
// kernel: tpu_custom_call.1
$region0: #{tpu_custom_call.1}
  #allocation0 [shape = 'u32[]', space=smem, size = 0x4, offset = 0x4, fixed_abs, tag = 'smem constant byte address 0x4 - core index']
  #allocation1 [shape = 'u32[144,128]{1,0:T(1,128)}', space=vmem, size = 0x12000, scoped, tag = 'internal scratch']
  %s0 = inlined_call_operand.vmem [shape: f32[8,1], index: 0, kind: input, shape index: {}]
  %s1 = inlined_call_operand.vmem [shape: f32[1,128], index: 1, kind: input, shape index: {}]
  %s2 = inlined_call_operand.vmem [shape: f32[128,32], index: 2, kind: input, shape index: {}]
  %s3 = inlined_call_operand.hbm [shape: f32[8,32], index: 3, kind: output, shape index: {}]
  %s4 = sld [smem:[#allocation0]]
  $region22: #{tpu_custom_call.1} parent=0
    _
  %s6 = ssub.s32 1, %s4
  %s7 = scalar_select 0, %s6, %s4
  $region1: #{tpu_custom_call.1} parent=0
    #allocation2 [shape = 'u8[4096]{0}', space=vmem, size = 0x1000, scoped, tag = 'output window, operand 0, single buffered']
    #allocation3 [shape = 's32[1]{0}', space=sflag, size = 0x4, scoped, tag = 'scoped memory for tpu_custom_call.1']
    %8 = vsyncpa [#allocation3], 0
    // Predicated region
    $region2: #{tpu_custom_call.1} parent=1 // pred_check
      _
    $region3: #{tpu_custom_call.1} parent=1 // pred_check_branch
      %10 = sbr.rel (0) target = $region5
    $region4: #{tpu_custom_call.1} parent=1 // pred_region
      _
    $region5: #{tpu_custom_call.1} parent=1 // pred_fallthru
      _
    // Predicated region
    $region6: #{tpu_custom_call.1} parent=1 // pred_check
      _
    $region7: #{tpu_custom_call.1} parent=1 // pred_check_branch
      %12 = sbr.rel (0) target = $region9
    $region8: #{tpu_custom_call.1} parent=1 // pred_region
      _
    $region9: #{tpu_custom_call.1} parent=1 // pred_fallthru
      _
    // Predicated region
    $region10: #{tpu_custom_call.1} parent=1 // pred_check
      _
    $region11: #{tpu_custom_call.1} parent=1 // pred_check_branch
      %14 = sbr.rel (0) target = $region13
    $region12: #{tpu_custom_call.1} parent=1 // pred_region
      _
    $region13: #{tpu_custom_call.1} parent=1 // pred_fallthru
      _
    %v15 = vld [vmem:[%s0] sm:$0xff]
    %v16 = vld [vmem:[%s1] sm:$0x1]
    %v18 = vlaneseq
    %v19 = vshrl.u32 %v18, 7
    %v20 = vsub.s32 0, %v19
    %v21 = vrot.slane %v16, %v20
    %24 = vset.pattern.permute.xlu0 0
    %25 = vperm.xlu0 %24, %v15
    %v26 = vpop.permute.xlu0 %25
    %vm28 = vcmp.lt.f32.partialorder %v21, %v26
    %v29 = vsel %vm28, 1, 0
    %v30 = vcvt.s32.f32 %v29
    %31 = vrot.lane.b32.xlu0 %v30, 127
    %v32 = vpop.permute.xlu0 %31
    %v33 = vsub.f32 %v30, %v32
    %v34 = vld [vmem:[%s2] sm:$0xff]
    %v35 = vld [vmem:[%s2 + $0x8] sm:$0xff]
    %v36 = vld [vmem:[%s2 + $0x10] sm:$0xff]
    %v37 = vld [vmem:[%s2 + $0x18] sm:$0xff]
    %v38 = vld [vmem:[%s2 + $0x20] sm:$0xff]
    %v39 = vld [vmem:[%s2 + $0x28] sm:$0xff]
    %v40 = vld [vmem:[%s2 + $0x30] sm:$0xff]
    %v41 = vld [vmem:[%s2 + $0x38] sm:$0xff]
    %v42 = vld [vmem:[%s2 + $0x40] sm:$0xff]
    %v43 = vld [vmem:[%s2 + $0x48] sm:$0xff]
    %v44 = vld [vmem:[%s2 + $0x50] sm:$0xff]
    %v45 = vld [vmem:[%s2 + $0x58] sm:$0xff]
    %v46 = vld [vmem:[%s2 + $0x60] sm:$0xff]
    %v47 = vld [vmem:[%s2 + $0x68] sm:$0xff]
    %v48 = vld [vmem:[%s2 + $0x70] sm:$0xff]
    %v49 = vld [vmem:[%s2 + $0x78] sm:$0xff]
    %50 = vmatprep.subr.mxu0 0.0
    %51 = vmatpush1.msra.mxu0 %v34
    %52 = vmatprep.subr.mxu0 0.0
    %53 = vmatpush1.msra.mxu0 %v35
    %54 = vmatprep.subr.mxu0 0.0
    %55 = vmatpush1.msra.mxu0 %v36
    %56 = vmatprep.subr.mxu0 0.0
    %57 = vmatpush1.msra.mxu0 %v37
    %58 = vmatprep.subr.mxu0 0.0
    %59 = vmatpush1.msra.mxu0 %v38
    %60 = vmatprep.subr.mxu0 0.0
    %61 = vmatpush1.msra.mxu0 %v39
    %62 = vmatprep.subr.mxu0 0.0
    %63 = vmatpush1.msra.mxu0 %v40
    %64 = vmatprep.subr.mxu0 0.0
    %65 = vmatpush1.msra.mxu0 %v41
    %66 = vmatprep.subr.mxu0 0.0
    %67 = vmatpush1.msra.mxu0 %v42
    %68 = vmatprep.subr.mxu0 0.0
    %69 = vmatpush1.msra.mxu0 %v43
    %70 = vmatprep.subr.mxu0 0.0
    %71 = vmatpush1.msra.mxu0 %v44
    %72 = vmatprep.subr.mxu0 0.0
    %73 = vmatpush1.msra.mxu0 %v45
    %74 = vmatprep.subr.mxu0 0.0
    %75 = vmatpush1.msra.mxu0 %v46
    %76 = vmatprep.subr.mxu0 0.0
    %77 = vmatpush1.msra.mxu0 %v47
    %78 = vmatprep.subr.mxu0 0.0
    %79 = vmatpush1.msra.mxu0 %v48
    %80 = vmatprep.subr.mxu0 0.0
    %81 = vmatpush1.msra.mxu0 %v49
    %82 = vmatprep.subr.mxu0 0.0
    %83 = vmatpush1.msra.mxu0 0.0
    %84 = vmatprep.subr.mxu0 0.0
    %85 = vmatpush1.msra.mxu0 0.0
    %86 = vmatprep.subr.mxu0 0.0
    %87 = vmatpush1.msra.mxu0 0.0
    %88 = vmatprep.subr.mxu0 0.0
    %89 = vmatpush1.msra.mxu0 0.0
    %90 = vmatprep.subr.mxu0 0.0
    %91 = vmatpush1.msra.mxu0 0.0
    %92 = vmatprep.subr.mxu0 0.0
    %93 = vmatpush1.msra.mxu0 0.0
    %94 = vmatprep.subr.mxu0 0.0
    %95 = vmatpush1.msra.mxu0 0.0
    %96 = vmatprep.subr.mxu0 0.0
    %97 = vmatpush1.msra.mxu0 0.0
    %98 = vmatprep.subr.mxu0 0.0
    %99 = vmatpush1.msra.mxu0 0.0
    %100 = vmatprep.subr.mxu0 0.0
    %101 = vmatpush1.msra.mxu0 0.0
    %102 = vmatprep.subr.mxu0 0.0
    %103 = vmatpush1.msra.mxu0 0.0
    %104 = vmatprep.subr.mxu0 0.0
    %105 = vmatpush1.msra.mxu0 0.0
    %106 = vmatprep.subr.mxu0 0.0
    %107 = vmatpush1.msra.mxu0 0.0
    %108 = vmatprep.subr.mxu0 0.0
    %109 = vmatpush1.msra.mxu0 0.0
    %110 = vmatprep.subr.mxu0 0.0
    %111 = vmatpush1.msra.mxu0 0.0
    %112 = vmatprep.subr.mxu0 0.0
    %113 = vmatpush1.msra.mxu0 0.0
    %114 = vmatprep.mubr.f32.mxu0 0.0
    %115 = vmatmul.mubr.f32.gmra.mrb[0].mxu0 %v33
    %v116 = vpop.f32.mrb[0].mxu0
    %v117 = vadd.f32 0.0, %v116
    %v118 = vpop.f32.mrb[0].mxu0
    %119 = vdwg.mxu0
    %vm120 = vcmask 261120
    %121 = vst.msk [vmem:[#allocation2] sm:$0xff] %vm120, %v117
    // Predicated region
    $region14: #{tpu_custom_call.1} parent=1 // pred_check
      _
    $region15: #{tpu_custom_call.1} parent=1 // pred_check_branch
      %123 = sbr.rel (0) target = $region17
    $region16: #{tpu_custom_call.1} parent=1 // pred_region
      %s125 = ssub.s32 128, 128
      %126 = vsyncadd [#allocation3], %s125
      %s128 = sshll.u32 [#allocation2], 4
      %s129 = int_to_ptr.vmem [resolvable:$true] %s128
      %131 = dma.vmem_to_hbm [thread:$0]  %s129, 128, %s3, [#allocation3]
    $region17: #{tpu_custom_call.1} parent=1 // pred_fallthru
      _
    // Predicated region
    $region18: #{tpu_custom_call.1} parent=1 // pred_check
      _
    $region19: #{tpu_custom_call.1} parent=1 // pred_check_branch
      %133 = sbr.rel (0) target = $region21
    $region20: #{tpu_custom_call.1} parent=1 // pred_region
      %134 = dma.done [#allocation3], 128
    $region21: #{tpu_custom_call.1} parent=1 // pred_fallthru
      _
    %135 = vsyncpa [#allocation3], 1

</llo_original>
